<compile_context>
chip_gen: v7x
topology: tpu7x:2x2x1
jax: 0.10.0
libtpu: 0.0.40
codegen_flags: <defaults>
</compile_context>

<pallas_src>
import jax
import jax.numpy as jnp
from jax.experimental import pallas as pl
from jax.experimental.pallas import tpu as pltpu


def _round_up(x, m):
    return (x + m - 1) // m * m


# ---------------------------------------------------------------------------
# Kernels
# ---------------------------------------------------------------------------

def _linear_kernel_fused(x_ref, w_ref, b_ref, o_ref):
    # Whole K fits in one tile: single MXU pass + bias add + store.
    # x_ref: (tm, K)  w_ref: (K, Np)  b_ref: (1, Np)  o_ref: (tm, Np)
    o_ref[...] = (
        jnp.dot(x_ref[...], w_ref[...], preferred_element_type=jnp.float32)
        + b_ref[...]
    ).astype(o_ref.dtype)


def _linear_kernel_acc(x_ref, w_ref, b_ref, o_ref, acc_ref):
    # K is tiled: accumulate in f32 VMEM scratch across the K grid axis.
    # x_ref: (tm, tk)  w_ref: (tk, Np)  b_ref: (1, Np)
    # o_ref: (tm, Np)  acc_ref: (tm, Np) f32 scratch (persists across k steps)
    k = pl.program_id(1)

    @pl.when(k == 0)
    def _():
        # Fold the bias into the accumulator init -> epilogue is a pure store.
        acc_ref[...] = jnp.broadcast_to(b_ref[...], acc_ref.shape).astype(
            jnp.float32
        )

    acc_ref[...] += jnp.dot(
        x_ref[...], w_ref[...], preferred_element_type=jnp.float32
    )

    @pl.when(k == pl.num_programs(1) - 1)
    def _():
        o_ref[...] = acc_ref[...].astype(o_ref.dtype)


# ---------------------------------------------------------------------------
# Wrapper
# ---------------------------------------------------------------------------

def _choose_tiles(M, K, Np, dtype_bytes=4, vmem_budget=24 * 1024 * 1024):
    """Pick (tm, tk) so double-buffered tiles + resident weights + acc scratch
    fit the smallest-generation scoped VMEM budget (v7x: 64 MiB physical)."""
    tk = K if K <= 512 else 512
    tm = min(512, _round_up(M, 8))

    def need(tm_, tk_):
        # 2x-buffered x tile + 2x-buffered out tile + 2x-buffered w tile
        # + f32 acc scratch.
        return (
            2 * tm_ * tk_ + 2 * tm_ * Np + 2 * tk_ * Np
        ) * dtype_bytes + tm_ * Np * 4

    while tm > 8 and need(tm, tk) > vmem_budget:
        tm = max(8, (tm // 2) // 8 * 8)
    return tm, tk


def pallas_linear(x2d, w, b):
    """y = x2d @ w + b as a tiled, pipelined Pallas kernel.

    x2d: (M, K) float32, w: (K, N) float32, b: (N,) float32 -> (M, N) float32.
    """
    M, K = x2d.shape
    K2, N = w.shape
    assert K == K2
    dtype = x2d.dtype

    # Lane-dense output: pad N up to a multiple of 128.  Extra columns are
    # zero weights / zero bias and get sliced off after the call.
    Np = _round_up(max(N, 128), 128)

    tm, tk = _choose_tiles(M, K, Np)
    Mp = _round_up(M, tm)
    Kp = _round_up(K, tk)

    # Zero-pad so every block is full-size (zero rows/cols contribute 0 to
    # the accumulation; padded rows/cols are sliced off below).
    if Mp != M or Kp != K:
        x2d = jnp.pad(x2d, ((0, Mp - M), (0, Kp - K)))
    if Kp != K or Np != N:
        w = jnp.pad(w, ((0, Kp - K), (0, Np - N)))
    if Np != N:
        b = jnp.pad(b, (0, Np - N))
    b2d = b.reshape(1, Np)

    grid_m = Mp // tm
    grid_k = Kp // tk

    compiler_params = pltpu.CompilerParams(
        vmem_limit_bytes=40 * 1024 * 1024,
        dimension_semantics=(
            ("parallel",) if grid_k == 1 else ("parallel", "arbitrary")
        ),
    )

    if grid_k == 1:
        # K fits in a single tile: no accumulator scratch, no phase predication.
        y = pl.pallas_call(
            _linear_kernel_fused,
            out_shape=jax.ShapeDtypeStruct((Mp, Np), dtype),
            grid=(grid_m,),
            in_specs=[
                pl.BlockSpec((tm, Kp), lambda i: (i, 0)),   # x: streamed tiles
                pl.BlockSpec((Kp, Np), lambda i: (0, 0)),   # w: resident
                pl.BlockSpec((1, Np), lambda i: (0, 0)),    # b: resident
            ],
            out_specs=pl.BlockSpec((tm, Np), lambda i: (i, 0)),
            compiler_params=compiler_params,
        )(x2d, w, b2d)
    else:
        y = pl.pallas_call(
            _linear_kernel_acc,
            out_shape=jax.ShapeDtypeStruct((Mp, Np), dtype),
            grid=(grid_m, grid_k),
            in_specs=[
                pl.BlockSpec((tm, tk), lambda i, k: (i, k)),  # x: streamed
                pl.BlockSpec((tk, Np), lambda i, k: (k, 0)),  # w: per-k tile
                pl.BlockSpec((1, Np), lambda i, k: (0, 0)),   # b: resident
            ],
            out_specs=pl.BlockSpec((tm, Np), lambda i, k: (i, 0)),
            scratch_shapes=[pltpu.VMEM((tm, Np), jnp.float32)],
            compiler_params=compiler_params,
        )(x2d, w, b2d)

    if Mp != M or Np != N:
        y = y[:M, :N]
    return y


class ArrayPallas:
    """JAX/Pallas equivalent of the PyTorch `Array` module with a Linear sublayer."""
    # TODO(synk): the PyTorch module accepts an arbitrary `sublayer`; only a
    # Linear sublayer (the typical case) is implemented here.

    def __init__(self, element_num, element_input_size, element_output_size, w, b):
        self.element_num = element_num
        self.element_input_size = element_input_size
        self.element_output_size = element_output_size
        self.w = w  # (element_input_size, element_output_size)
        self.b = b  # (element_output_size,)

    def __call__(self, x):
        batchsize = x.shape[0]
        # reshape glue (plain JAX, contiguous); hot path in Pallas
        x2d = x.reshape(batchsize * self.element_num, -1)
        y2d = pallas_linear(x2d, self.w, self.b)
        return y2d.reshape(batchsize, -1)


if __name__ == "__main__":
    # Small, deterministic configuration matching the module's forward.
    batch = 2
    element_num = 4
    element_input_size = 32
    element_output_size = 16

    key = jax.random.PRNGKey(0)
    kx, kw, kb = jax.random.split(key, 3)

    x = jax.random.normal(
        kx, (batch, element_num * element_input_size), dtype=jnp.float32
    )
    # Deterministic "sublayer" (Linear) parameters, initialized in-script.
    w = jax.random.normal(
        kw, (element_input_size, element_output_size), dtype=jnp.float32
    ) * 0.1
    b = jax.random.normal(kb, (element_output_size,), dtype=jnp.float32) * 0.1

    model = ArrayPallas(element_num, element_input_size, element_output_size, w, b)

    out = model(x)
    out = jax.block_until_ready(out)

    # Reference check (pure JAX) for the same semantics as the PyTorch module.
    ref = (x.reshape(batch * element_num, -1) @ w + b).reshape(batch, -1)
    assert out.shape == (batch, element_num * element_output_size)
    assert jnp.allclose(out, ref, atol=1e-5, rtol=1e-5)

    # Also exercise the K-tiled accumulation path with a larger element size.
    big_in, big_out, big_elems, big_batch = 1024, 64, 8, 8
    kx2, kw2, kb2 = jax.random.split(jax.random.PRNGKey(1), 3)
    x2 = jax.random.normal(kx2, (big_batch, big_elems * big_in), dtype=jnp.float32)
    w2 = jax.random.normal(kw2, (big_in, big_out), dtype=jnp.float32) * 0.02
    b2 = jax.random.normal(kb2, (big_out,), dtype=jnp.float32) * 0.02
    model2 = ArrayPallas(big_elems, big_in, big_out, w2, b2)
    out2 = jax.block_until_ready(model2(x2))
    ref2 = (x2.reshape(big_batch * big_elems, -1) @ w2 + b2).reshape(big_batch, -1)
    assert jnp.allclose(out2, ref2, atol=1e-3, rtol=1e-3)

    print("KERNEL_OK")
</pallas_src>

<mosaic_0001>
module attributes {stable_mosaic.version = 11 : i64} {
  func.func @_linear_kernel_fused(%arg0: i32, %arg1: memref<8x32xf32, #tpu.memory_space<vmem>>, %arg2: memref<32x128xf32, #tpu.memory_space<vmem>>, %arg3: memref<1x128xf32, #tpu.memory_space<vmem>>, %arg4: memref<8x128xf32, #tpu.memory_space<vmem>>) attributes {dimension_semantics = [#tpu.dimension_semantics<parallel>], iteration_bounds = array<i64: 1>, scalar_prefetch = 0 : i64, scratch_operands = 0 : i64, tpu.core_type = #tpu.core_type<tc>, window_params = [{transform_indices = @transform_0, window_bounds = array<i64: 8, 32>}, {pipeline_mode = #tpu.pipeline_mode<synchronous>, transform_indices = @transform_1, window_bounds = array<i64: 32, 128>}, {pipeline_mode = #tpu.pipeline_mode<synchronous>, transform_indices = @transform_2, window_bounds = array<i64: 1, 128>}, {transform_indices = @transform_3, window_bounds = array<i64: 8, 128>}]} {
    %c0 = arith.constant 0 : index
    %c0_0 = arith.constant 0 : index
    %0 = vector.load %arg1[%c0, %c0_0] : memref<8x32xf32, #tpu.memory_space<vmem>>, vector<8x32xf32>
    %c0_1 = arith.constant 0 : index
    %c0_2 = arith.constant 0 : index
    %1 = vector.load %arg2[%c0_1, %c0_2] : memref<32x128xf32, #tpu.memory_space<vmem>>, vector<32x128xf32>
    %cst = arith.constant dense<0.000000e+00> : vector<8x128xf32>
    %2 = tpu.matmul %0, %1, %cst {dimension_numbers = #tpu.dot_dimension_numbers<[1], [0], [0], [1], [0, 0, 1, 1], [], []>} : vector<8x32xf32>, vector<32x128xf32>, vector<8x128xf32> -> vector<8x128xf32>
    %c0_3 = arith.constant 0 : index
    %c0_4 = arith.constant 0 : index
    %3 = vector.load %arg3[%c0_3, %c0_4] : memref<1x128xf32, #tpu.memory_space<vmem>>, vector<1x128xf32>
    %4 = vector.broadcast %3 : vector<1x128xf32> to vector<8x128xf32>
    %5 = arith.addf %2, %4 : vector<8x128xf32>
    %c0_5 = arith.constant 0 : index
    %c0_6 = arith.constant 0 : index
    %6 = vector.load %arg4[%c0_5, %c0_6] : memref<8x128xf32, #tpu.memory_space<vmem>>, vector<8x128xf32>
    tpu.vector_store %arg4[%c0_5, %c0_6], %5 {strides = array<i32>} : memref<8x128xf32, #tpu.memory_space<vmem>>, vector<8x128xf32>,
    return
  }
  func.func @transform_0(%arg0: i32) -> (i32, i32) {
    %c0_i32 = arith.constant 0 : i32
    %c0_i32_0 = arith.constant 0 : i32
    return %arg0, %c0_i32 : i32, i32
  }
  func.func @transform_1(%arg0: i32) -> (i32, i32) {
    %c0_i32 = arith.constant 0 : i32
    %c0_i32_0 = arith.constant 0 : i32
    %c0_i32_1 = arith.constant 0 : i32
    return %c0_i32, %c0_i32_0 : i32, i32
  }
  func.func @transform_2(%arg0: i32) -> (i32, i32) {
    %c0_i32 = arith.constant 0 : i32
    %c0_i32_0 = arith.constant 0 : i32
    %c0_i32_1 = arith.constant 0 : i32
    return %c0_i32, %c0_i32_0 : i32, i32
  }
  func.func @transform_3(%arg0: i32) -> (i32, i32) {
    %c0_i32 = arith.constant 0 : i32
    %c0_i32_0 = arith.constant 0 : i32
    return %arg0, %c0_i32 : i32, i32
  }
}

</mosaic_0001>

<llo_original>
// kernel: tpu_custom_call.1
$region0: #{tpu_custom_call.1}
  #allocation0 [shape = 'u32[]', space=smem, size = 0x4, offset = 0x4, fixed_abs, tag = 'smem constant byte address 0x4 - core index']
  #allocation1 [shape = 'u32[144,128]{1,0:T(1,128)}', space=vmem, size = 0x12000, scoped, tag = 'internal scratch']
  %s0 = inlined_call_operand.hbm [shape: f32[8,32], index: 0, kind: input, shape index: {}]
  %s1 = inlined_call_operand.hbm [shape: f32[32,128], index: 1, kind: input, shape index: {}]
  %s2 = inlined_call_operand.vmem [shape: f32[1,128], index: 2, kind: input, shape index: {}]
  %s3 = inlined_call_operand.hbm [shape: f32[8,128], index: 3, kind: output, shape index: {}]
  %s4 = sld [smem:[#allocation0]]
  $region30: #{tpu_custom_call.1} parent=0
    _
  %s6 = ssub.s32 1, %s4
  %s7 = scalar_select 0, %s6, %s4
  $region1: #{tpu_custom_call.1} parent=0
    #allocation2 [shape = 'u8[4096]{0}', space=vmem, size = 0x1000, scoped, tag = 'input window, operand 0, single buffered']
    #allocation3 [shape = 's32[1]{0}', space=sflag, size = 0x4, scoped, tag = 'scoped memory for tpu_custom_call.1']
    #allocation4 [shape = 's32[1]{0}', space=sflag, size = 0x4, scoped, tag = 'scoped memory for tpu_custom_call.1']
    #allocation5 [shape = 'u8[16384]{0}', space=vmem, size = 0x4000, scoped, tag = 'input window, operand 1, single buffered']
    #allocation6 [shape = 's32[1]{0}', space=sflag, size = 0x4, scoped, tag = 'scoped memory for tpu_custom_call.1']
    #allocation7 [shape = 'u8[4096]{0}', space=vmem, size = 0x1000, scoped, tag = 'output window, operand 0, single buffered']
    %8 = vsyncpa [#allocation3], 0
    %9 = vsyncpa [#allocation6], 0
    %10 = vsyncpa [#allocation4], 0
    // Predicated region
    $region2: #{tpu_custom_call.1} parent=1 // pred_check
      _
    $region3: #{tpu_custom_call.1} parent=1 // pred_check_branch
      %12 = sbr.rel (0) target = $region5
    $region4: #{tpu_custom_call.1} parent=1 // pred_region
      %s14 = ssub.s32 128, 128
      %15 = vsyncadd [#allocation3], %s14
      %s17 = sshll.u32 [#allocation2], 4
      %s18 = int_to_ptr.vmem [resolvable:$true] %s17
      %20 = dma.hbm_to_vmem [thread:$0]  %s0, 128, %s18, [#allocation3]
    $region5: #{tpu_custom_call.1} parent=1 // pred_fallthru
      _
    // Predicated region
    $region6: #{tpu_custom_call.1} parent=1 // pred_check
      _
    $region7: #{tpu_custom_call.1} parent=1 // pred_check_branch
      %22 = sbr.rel (0) target = $region9
    $region8: #{tpu_custom_call.1} parent=1 // pred_region
      %s24 = ssub.s32 512, 512
      %25 = vsyncadd [#allocation6], %s24
      %s26 = sshll.u32 [#allocation5], 4
      %s27 = int_to_ptr.vmem [resolvable:$true] %s26
      %32 = dma.hbm_to_vmem [thread:$0]  %s1, 512, %s27, [#allocation6], 128, 128, 8
    $region9: #{tpu_custom_call.1} parent=1 // pred_fallthru
      _
    // Predicated region
    $region10: #{tpu_custom_call.1} parent=1 // pred_check
      _
    $region11: #{tpu_custom_call.1} parent=1 // pred_check_branch
      %34 = sbr.rel (0) target = $region13
    $region12: #{tpu_custom_call.1} parent=1 // pred_region
      _
    $region13: #{tpu_custom_call.1} parent=1 // pred_fallthru
      _
    // Predicated region
    $region14: #{tpu_custom_call.1} parent=1 // pred_check
      _
    $region15: #{tpu_custom_call.1} parent=1 // pred_check_branch
      %36 = sbr.rel (0) target = $region17
    $region16: #{tpu_custom_call.1} parent=1 // pred_region
      %37 = dma.done [#allocation3], 128
    $region17: #{tpu_custom_call.1} parent=1 // pred_fallthru
      _
    // Predicated region
    $region18: #{tpu_custom_call.1} parent=1 // pred_check
      _
    $region19: #{tpu_custom_call.1} parent=1 // pred_check_branch
      %39 = sbr.rel (0) target = $region21
    $region20: #{tpu_custom_call.1} parent=1 // pred_region
      %40 = dma.done [#allocation6], 512
    $region21: #{tpu_custom_call.1} parent=1 // pred_fallthru
      _
    %v41 = vld [vmem:[#allocation2] sm:$0xff]
    %v42 = vld [vmem:[#allocation5] sm:$0xff]
    %v43 = vld [vmem:[#allocation5 + $0x8] sm:$0xff]
    %v44 = vld [vmem:[#allocation5 + $0x10] sm:$0xff]
    %v45 = vld [vmem:[#allocation5 + $0x18] sm:$0xff]
    %v46 = vld [vmem:[%s2] sm:$0x1]
    %v48 = vlaneseq
    %v49 = vshrl.u32 %v48, 7
    %v50 = vsub.s32 0, %v49
    %v51 = vrot.slane %v46, %v50
    %vm53 = vcmask 261120
    %v55 = vsel %vm53, %v41, 0
    %57 = vmatprep.subr.mxu0 0.0
    %58 = vmatpush1.msra.mxu0 %v42
    %59 = vmatprep.subr.mxu0 0.0
    %60 = vmatpush1.msra.mxu0 %v43
    %61 = vmatprep.subr.mxu0 0.0
    %62 = vmatpush1.msra.mxu0 %v44
    %63 = vmatprep.subr.mxu0 0.0
    %64 = vmatpush1.msra.mxu0 %v45
    %65 = vmatprep.subr.mxu0 0.0
    %66 = vmatpush1.msra.mxu0 0.0
    %67 = vmatprep.subr.mxu0 0.0
    %68 = vmatpush1.msra.mxu0 0.0
    %69 = vmatprep.subr.mxu0 0.0
    %70 = vmatpush1.msra.mxu0 0.0
    %71 = vmatprep.subr.mxu0 0.0
    %72 = vmatpush1.msra.mxu0 0.0
    %73 = vmatprep.subr.mxu0 0.0
    %74 = vmatpush1.msra.mxu0 0.0
    %75 = vmatprep.subr.mxu0 0.0
    %76 = vmatpush1.msra.mxu0 0.0
    %77 = vmatprep.subr.mxu0 0.0
    %78 = vmatpush1.msra.mxu0 0.0
    %79 = vmatprep.subr.mxu0 0.0
    %80 = vmatpush1.msra.mxu0 0.0
    %81 = vmatprep.subr.mxu0 0.0
    %82 = vmatpush1.msra.mxu0 0.0
    %83 = vmatprep.subr.mxu0 0.0
    %84 = vmatpush1.msra.mxu0 0.0
    %85 = vmatprep.subr.mxu0 0.0
    %86 = vmatpush1.msra.mxu0 0.0
    %87 = vmatprep.subr.mxu0 0.0
    %88 = vmatpush1.msra.mxu0 0.0
    %89 = vmatprep.subr.mxu0 0.0
    %90 = vmatpush1.msra.mxu0 0.0
    %91 = vmatprep.subr.mxu0 0.0
    %92 = vmatpush1.msra.mxu0 0.0
    %93 = vmatprep.subr.mxu0 0.0
    %94 = vmatpush1.msra.mxu0 0.0
    %95 = vmatprep.subr.mxu0 0.0
    %96 = vmatpush1.msra.mxu0 0.0
    %97 = vmatprep.subr.mxu0 0.0
    %98 = vmatpush1.msra.mxu0 0.0
    %99 = vmatprep.subr.mxu0 0.0
    %100 = vmatpush1.msra.mxu0 0.0
    %101 = vmatprep.subr.mxu0 0.0
    %102 = vmatpush1.msra.mxu0 0.0
    %103 = vmatprep.subr.mxu0 0.0
    %104 = vmatpush1.msra.mxu0 0.0
    %105 = vmatprep.subr.mxu0 0.0
    %106 = vmatpush1.msra.mxu0 0.0
    %107 = vmatprep.subr.mxu0 0.0
    %108 = vmatpush1.msra.mxu0 0.0
    %109 = vmatprep.subr.mxu0 0.0
    %110 = vmatpush1.msra.mxu0 0.0
    %111 = vmatprep.subr.mxu0 0.0
    %112 = vmatpush1.msra.mxu0 0.0
    %113 = vmatprep.subr.mxu0 0.0
    %114 = vmatpush1.msra.mxu0 0.0
    %115 = vmatprep.subr.mxu0 0.0
    %116 = vmatpush1.msra.mxu0 0.0
    %117 = vmatprep.subr.mxu0 0.0
    %118 = vmatpush1.msra.mxu0 0.0
    %119 = vmatprep.subr.mxu0 0.0
    %120 = vmatpush1.msra.mxu0 0.0
    %121 = vmatprep.mubr.f32.mxu0 0.0
    %122 = vmatmul.mubr.f32.gmra.mrb[0].mxu0 %v55
    %v123 = vpop.f32.mrb[0].mxu0
    %v124 = vadd.f32 %v51, %v123
    %v125 = vpop.f32.mrb[0].mxu0
    %126 = vdwg.mxu0
    %127 = vst [vmem:[#allocation7] sm:$0xff] %v124
    // Predicated region
    $region22: #{tpu_custom_call.1} parent=1 // pred_check
      _
    $region23: #{tpu_custom_call.1} parent=1 // pred_check_branch
      %129 = sbr.rel (0) target = $region25
    $region24: #{tpu_custom_call.1} parent=1 // pred_region
      %s131 = ssub.s32 128, 128
      %132 = vsyncadd [#allocation4], %s131
      %s134 = sshll.u32 [#allocation7], 4
      %s135 = int_to_ptr.vmem [resolvable:$true] %s134
      %137 = dma.vmem_to_hbm [thread:$0]  %s135, 128, %s3, [#allocation4]
    $region25: #{tpu_custom_call.1} parent=1 // pred_fallthru
      _
    // Predicated region
    $region26: #{tpu_custom_call.1} parent=1 // pred_check
      _
    $region27: #{tpu_custom_call.1} parent=1 // pred_check_branch
      %139 = sbr.rel (0) target = $region29
    $region28: #{tpu_custom_call.1} parent=1 // pred_region
      %140 = dma.done [#allocation4], 128
    $region29: #{tpu_custom_call.1} parent=1 // pred_fallthru
      _
    %141 = vsyncpa [#allocation3], 1
    %142 = vsyncpa [#allocation6], 1
    %143 = vsyncpa [#allocation4], 1

</llo_original>
